<compile_context>
chip_gen: v7x
topology: tpu7x:2x2x1
jax: 0.10.0
libtpu: 0.0.40
codegen_flags: <defaults>
</compile_context>

<pallas_src>
import functools

import jax
import jax.numpy as jnp
from jax import lax
from jax.experimental import pallas as pl
from jax.experimental.pallas import tpu as pltpu


_LANES = 128
_TR_LOSS = 2048          # loss-reduction row-tile (rows of 128 lanes)


def _round_up(x, m):
    return (x + m - 1) // m * m


def _compute_vmem_limit():
    """Generation-dependent scoped-VMEM limit (leave ~25% headroom)."""
    cap = 64 * 1024 * 1024
    try:
        info = pltpu.get_tpu_info()
        cap = int(getattr(info, "vmem_capacity_bytes", cap) or cap)
    except Exception:
        pass
    return max(32 * 1024 * 1024, min(cap * 3 // 4, 96 * 1024 * 1024))


_VMEM_LIMIT = _compute_vmem_limit()


def _conv_tile_rows(m, k_dim):
    """Adaptive M tile for the conv matmuls: bigger tiles when K is small so the
    ~0.35us per-grid-step cost amortizes; 16-row granularity for bf16 packing."""
    per_row_bytes = k_dim * 2 + _LANES * 4      # bf16 patch row + (<=f32) output row
    cap = max(256, min(2048, (4 * 1024 * 1024) // per_row_bytes))
    cap = (cap // 16) * 16
    return min(cap, _round_up(m, 16))


def _pad_rows(x, m_pad):
    m = x.shape[0]
    if m_pad != m:
        x = jnp.pad(x, ((0, m_pad - m), (0, 0)))
    return x


# ----------------------------------------------------------------------------
# Pallas kernels
# ----------------------------------------------------------------------------

def _mm_bias_act_kernel(p_ref, w_ref, b_ref, o_ref, *, lrelu):
    """out_tile = (patches_tile @ W + b), optional LeakyReLU(0.2). bf16 in, f32 acc."""
    z = jnp.dot(p_ref[...], w_ref[...], preferred_element_type=jnp.float32)
    z = z + b_ref[...]
    if lrelu:
        z = jnp.where(z > 0, z, 0.2 * z)
    o_ref[...] = z.astype(o_ref.dtype)


def _mm_stats_kernel(p_ref, w_ref, z_ref, sum_ref, sq_ref):
    """BN pass 1: z_tile = patches_tile @ W (f32 acc, stored bf16) plus per-core
    column sum / sumsq accumulators across the 'arbitrary' M axis.
    Correctness invariant: padded patch rows are zero and there is NO bias in
    pass 1, so padded rows contribute exactly 0 to the statistics."""
    mi = pl.program_id(1)

    @pl.when(mi == 0)
    def _init():
        sum_ref[...] = jnp.zeros_like(sum_ref)
        sq_ref[...] = jnp.zeros_like(sq_ref)

    z = jnp.dot(p_ref[...], w_ref[...], preferred_element_type=jnp.float32)
    z_ref[...] = z.astype(z_ref.dtype)
    sum_ref[...] += jnp.sum(z, axis=0, keepdims=True)[None]
    sq_ref[...] += jnp.sum(z * z, axis=0, keepdims=True)[None]


def _bn_lrelu_kernel(z_ref, sum_ref, sq_ref, o_ref, *, count, eps):
    """BN pass 2: combine per-core partial stats, train-mode normalize (biased
    var, clamped at 0) + LeakyReLU(0.2); gamma=1, beta=0 (synthetic)."""
    s = jnp.sum(sum_ref[...], axis=0)                 # (1, 128)
    q = jnp.sum(sq_ref[...], axis=0)                  # (1, 128)
    mean = s / count
    # NOTE: E[z^2]-E[z]^2 in f32; clamp guards against cancellation going negative.
    var = jnp.maximum(q / count - mean * mean, 0.0)
    inv = lax.rsqrt(var + eps)
    zn = (z_ref[...].astype(jnp.float32) - mean) * inv
    o_ref[...] = jnp.where(zn > 0, zn, 0.2 * zn).astype(o_ref.dtype)


def _mse_partial_kernel(x_ref, xr_ref, sse_ref):
    """Tiled sum-of-squared-errors; (1,128) lane accumulator per core, no
    cross-lane reduction in the hot loop."""
    @pl.when(pl.program_id(1) == 0)
    def _init():
        sse_ref[...] = jnp.zeros_like(sse_ref)

    d = x_ref[...].astype(jnp.float32) - xr_ref[...].astype(jnp.float32)
    sse_ref[...] += jnp.sum(d * d, axis=0, keepdims=True)[None]


def _gen_loss_epilogue_kernel(cb_ref, dw_ref, sse_ref, lf_ref,
                              loss_ref, rec_ref, gen_ref,
                              *, n_elems, lf_elems, rec_w, perc_w,
                              adaptive_w, codebook_w):
    """Combine per-core SSE partials + hinge gen loss + total generator loss."""
    sse_lane = jnp.sum(sse_ref[...], axis=0)                       # (1, 128)
    rec = jnp.sum(sse_lane, axis=1, keepdims=True) / n_elems       # (1, 1) = F.mse_loss
    lf = lf_ref[...].astype(jnp.float32)
    lf_sum = jnp.sum(jnp.sum(lf, axis=1, keepdims=True), axis=0, keepdims=True)
    gen = -lf_sum / lf_elems                                       # hinge_gen_loss
    # TODO(synk): LPIPS perceptual loss needs pretrained VGG weights; p_loss contributes 0.
    p_loss = jnp.zeros_like(rec)
    loss = (rec_w * rec + perc_w * p_loss
            + adaptive_w * dw_ref[...] * gen
            + codebook_w * cb_ref[...])
    loss_ref[...] = loss
    rec_ref[...] = rec
    gen_ref[...] = gen


def _disc_loss_kernel(dw_ref, lr_ref, lf_ref, out_ref, *, nr, nf):
    """hinge_d_loss over the (tiny) patch-logit maps."""
    lr = lr_ref[...].astype(jnp.float32)
    lf = lf_ref[...].astype(jnp.float32)
    loss_real = jnp.sum(jnp.sum(jnp.maximum(1.0 - lr, 0.0), axis=1, keepdims=True),
                        axis=0, keepdims=True) / nr
    loss_fake = jnp.sum(jnp.sum(jnp.maximum(1.0 + lf, 0.0), axis=1, keepdims=True),
                        axis=0, keepdims=True) / nf
    out_ref[...] = dw_ref[...] * 0.5 * (loss_real + loss_fake)


# ----------------------------------------------------------------------------
# pallas_call wrappers
# ----------------------------------------------------------------------------

def pallas_conv_bias_act(patches, w_mat, bias, *, lrelu, out_dtype):
    """patches (M, K) bf16 @ w_mat (K, 128-lane-padded Cout) bf16 (+bias, +LeakyReLU)."""
    m, k = patches.shape
    cp = w_mat.shape[1]
    tm = _conv_tile_rows(m, k)
    m_pad = _round_up(m, tm)
    patches = _pad_rows(patches, m_pad)
    out_bytes = 2 if out_dtype == jnp.bfloat16 else 4
    cost = pl.CostEstimate(
        flops=2 * m_pad * k * cp, transcendentals=0,
        bytes_accessed=m_pad * k * 2 + k * cp * 2 + m_pad * cp * out_bytes)
    return pl.pallas_call(
        functools.partial(_mm_bias_act_kernel, lrelu=lrelu),
        grid=(m_pad // tm,),
        in_specs=[pl.BlockSpec((tm, k), lambda i: (i, 0)),
                  pl.BlockSpec((k, cp), lambda i: (0, 0)),
                  pl.BlockSpec((1, cp), lambda i: (0, 0))],
        out_specs=pl.BlockSpec((tm, cp), lambda i: (i, 0)),
        out_shape=jax.ShapeDtypeStruct((m_pad, cp), out_dtype),
        compiler_params=pltpu.CompilerParams(
            dimension_semantics=("parallel",), vmem_limit_bytes=_VMEM_LIMIT),
        cost_estimate=cost,
    )(patches, w_mat, bias)     # (m_pad, cp) lane-dense; caller keeps it lane-dense


def pallas_conv_bn_lrelu(patches, w_mat, *, eps=1e-5, out_dtype=jnp.bfloat16):
    """Conv (matmul) + train-mode BatchNorm (batch stats) + LeakyReLU(0.2)."""
    m, k = patches.shape
    cp = w_mat.shape[1]
    tm = _conv_tile_rows(m, k)
    nc = 2 if m >= 4 * tm else 1           # split stats matmul across v7x's 2 TCs
    m_pad = _round_up(m, nc * tm)
    patches = _pad_rows(patches, m_pad)
    mt = m_pad // (nc * tm)                # row-tiles per core

    # --- pass 1: matmul + per-core column stats (z stored bf16) ----------------
    cost1 = pl.CostEstimate(
        flops=2 * m_pad * k * cp, transcendentals=0,
        bytes_accessed=m_pad * k * 2 + k * cp * 2 + m_pad * cp * 2)
    z, csum, csq = pl.pallas_call(
        _mm_stats_kernel,
        grid=(nc, mt),
        in_specs=[pl.BlockSpec((tm, k), lambda c, i: (c * mt + i, 0)),
                  pl.BlockSpec((k, cp), lambda c, i: (0, 0))],
        out_specs=(pl.BlockSpec((tm, cp), lambda c, i: (c * mt + i, 0)),
                   pl.BlockSpec((1, 1, cp), lambda c, i: (c, 0, 0)),
                   pl.BlockSpec((1, 1, cp), lambda c, i: (c, 0, 0))),
        out_shape=(jax.ShapeDtypeStruct((m_pad, cp), jnp.bfloat16),
                   jax.ShapeDtypeStruct((nc, 1, cp), jnp.float32),
                   jax.ShapeDtypeStruct((nc, 1, cp), jnp.float32)),
        compiler_params=pltpu.CompilerParams(
            dimension_semantics=("parallel", "arbitrary"),
            vmem_limit_bytes=_VMEM_LIMIT),
        cost_estimate=cost1,
    )(patches, w_mat)

    # --- pass 2: normalize + LeakyReLU, tiled / parallel over M ---------------
    cost2 = pl.CostEstimate(
        flops=6 * m_pad * cp, transcendentals=cp,
        bytes_accessed=m_pad * cp * 2 + m_pad * cp * 2)
    out = pl.pallas_call(
        functools.partial(_bn_lrelu_kernel, count=float(m), eps=eps),
        grid=(m_pad // tm,),
        in_specs=[pl.BlockSpec((tm, cp), lambda i: (i, 0)),
                  pl.BlockSpec((nc, 1, cp), lambda i: (0, 0, 0)),
                  pl.BlockSpec((nc, 1, cp), lambda i: (0, 0, 0))],
        out_specs=pl.BlockSpec((tm, cp), lambda i: (i, 0)),
        out_shape=jax.ShapeDtypeStruct((m_pad, cp), out_dtype),
        compiler_params=pltpu.CompilerParams(
            dimension_semantics=("parallel",), vmem_limit_bytes=_VMEM_LIMIT),
        cost_estimate=cost2,
    )(z, csum, csq)
    return out


def _to_lane_rows(x, rows_pad):
    flat = x.reshape(-1)
    pad = rows_pad * _LANES - flat.shape[0]
    if pad:
        flat = jnp.pad(flat, (0, pad))
    return flat.reshape(rows_pad, _LANES)


def pallas_generator_loss(codebook_loss, inputs, recons, logits_fake, *,
                          rec_w, perc_w, adaptive_w, disc_w, codebook_w):
    lf = logits_fake.reshape(logits_fake.shape[0], -1).astype(jnp.float32)
    n = inputs.size
    rows = pl.cdiv(n, _LANES)
    tr = min(_TR_LOSS, _round_up(rows, 8))
    nc = 2 if rows >= 4 * tr else 1              # two-core split of the big reduction
    rows_pad = _round_up(rows, nc * tr)
    rt = rows_pad // (nc * tr)
    x2d = _to_lane_rows(inputs, rows_pad)
    xr2d = _to_lane_rows(recons, rows_pad)

    sse = pl.pallas_call(
        _mse_partial_kernel,
        grid=(nc, rt),
        in_specs=[pl.BlockSpec((tr, _LANES), lambda c, i: (c * rt + i, 0)),
                  pl.BlockSpec((tr, _LANES), lambda c, i: (c * rt + i, 0))],
        out_specs=pl.BlockSpec((1, 1, _LANES), lambda c, i: (c, 0, 0)),
        out_shape=jax.ShapeDtypeStruct((nc, 1, _LANES), jnp.float32),
        compiler_params=pltpu.CompilerParams(
            dimension_semantics=("parallel", "arbitrary"),
            vmem_limit_bytes=_VMEM_LIMIT),
        cost_estimate=pl.CostEstimate(flops=3 * rows_pad * _LANES, transcendentals=0,
                                      bytes_accessed=2 * rows_pad * _LANES * 4),
    )(x2d, xr2d)

    cb = jnp.asarray(codebook_loss, jnp.float32).reshape(1, 1)
    dw = jnp.asarray(disc_w, jnp.float32).reshape(1, 1)
    kern = functools.partial(
        _gen_loss_epilogue_kernel, n_elems=float(n), lf_elems=float(lf.size),
        rec_w=float(rec_w), perc_w=float(perc_w),
        adaptive_w=float(adaptive_w), codebook_w=float(codebook_w))
    s11 = jax.ShapeDtypeStruct((1, 1), jnp.float32)
    loss, rec, gen = pl.pallas_call(
        kern,
        grid=(1,),
        in_specs=[pl.BlockSpec((1, 1), lambda i: (0, 0)),
                  pl.BlockSpec((1, 1), lambda i: (0, 0)),
                  pl.BlockSpec((nc, 1, _LANES), lambda i: (0, 0, 0)),
                  pl.BlockSpec(lf.shape, lambda i: (0, 0))],
        out_specs=(pl.BlockSpec((1, 1), lambda i: (0, 0)),
                   pl.BlockSpec((1, 1), lambda i: (0, 0)),
                   pl.BlockSpec((1, 1), lambda i: (0, 0))),
        out_shape=(s11, s11, s11),
        compiler_params=pltpu.CompilerParams(
            dimension_semantics=("arbitrary",), vmem_limit_bytes=_VMEM_LIMIT),
    )(cb, dw, sse, lf)
    return loss[0, 0], rec[0, 0], gen[0, 0]


def pallas_disc_loss(logits_real, logits_fake, *, disc_w):
    # Patch-logit maps are tiny (N x OH x OW); a single-block reduction is enough.
    lr = logits_real.reshape(logits_real.shape[0], -1).astype(jnp.float32)
    lf = logits_fake.reshape(logits_fake.shape[0], -1).astype(jnp.float32)
    dw = jnp.asarray(disc_w, jnp.float32).reshape(1, 1)
    out = pl.pallas_call(
        functools.partial(_disc_loss_kernel, nr=float(lr.size), nf=float(lf.size)),
        grid=(1,),
        in_specs=[pl.BlockSpec((1, 1), lambda i: (0, 0)),
                  pl.BlockSpec(lr.shape, lambda i: (0, 0)),
                  pl.BlockSpec(lf.shape, lambda i: (0, 0))],
        out_specs=pl.BlockSpec((1, 1), lambda i: (0, 0)),
        out_shape=jax.ShapeDtypeStruct((1, 1), jnp.float32),
        compiler_params=pltpu.CompilerParams(
            dimension_semantics=("arbitrary",), vmem_limit_bytes=_VMEM_LIMIT),
    )(dw, lr, lf)
    return out[0, 0]


# ----------------------------------------------------------------------------
# Glue: NHWC im2col + PatchGAN discriminator (deterministic synthetic weights)
# ----------------------------------------------------------------------------

def im2col_nhwc(x, cin, k, stride, pad):
    """x: (N, H, W, C_lane_dense) -> patches (N*OH*OW, k*k*cin), column order (kh, kw, c).
    Only the first `cin` (real) channels are read; the channel slice is fused into
    the gather so the lane-dense conv output never takes a separate slice copy.
    TODO(synk): the k*k window gather is still materialized in HBM by XLA; a fully
    fused in-kernel gather (halo rows / strided DMA into VMEM) would remove it."""
    n, h, w, _ = x.shape
    xs = x[..., :cin]
    xp = jnp.pad(xs, ((0, 0), (pad, pad), (pad, pad), (0, 0)))
    oh = (h + 2 * pad - k) // stride + 1
    ow = (w + 2 * pad - k) // stride + 1
    cols = []
    for i in range(k):
        for j in range(k):
            cols.append(xp[:, i:i + stride * oh:stride, j:j + stride * ow:stride, :])
    patches = jnp.concatenate(cols, axis=-1)                  # (N, OH, OW, k*k*cin)
    return patches.reshape(n * oh * ow, k * k * cin).astype(jnp.bfloat16), oh, ow


def adopt_weight(weight, global_step, threshold=0, value=0.0):
    if isinstance(global_step, (int, float)):
        return value if global_step < threshold else weight
    return jnp.where(global_step < threshold, value, weight)


class PallasPatchGANDiscriminator:
    """pix2pix n-layer PatchGAN; every conv runs as a tiled Pallas MXU matmul."""
    KERNEL = 4
    PAD = 1
    COUT_PAD = 128   # lane-dense output width

    def __init__(self, key, input_nc=3, ndf=8, n_layers=3):
        # (cin, cout, stride, has_bias, batchnorm, leakyrelu)
        cfg = [(input_nc, ndf, 2, True, False, True)]
        nf_mult = 1
        for n in range(1, n_layers):
            nf_prev, nf_mult = nf_mult, min(2 ** n, 8)
            cfg.append((ndf * nf_prev, ndf * nf_mult, 2, False, True, True))
        nf_prev, nf_mult = nf_mult, min(2 ** n_layers, 8)
        cfg.append((ndf * nf_prev, ndf * nf_mult, 1, False, True, True))
        cfg.append((ndf * nf_mult, 1, 1, True, False, False))
        self.cfg = cfg
        self.params = []
        k = self.KERNEL
        for (cin, cout, _s, _hb, _bn, _lr) in cfg:
            key, wk = jax.random.split(key)
            # weight layout (kh, kw, cin, cout) matches im2col column order
            w = 0.02 * jax.random.normal(wk, (k, k, cin, cout), jnp.float32)
            w_mat = w.reshape(k * k * cin, cout)
            cpad = max(self.COUT_PAD, _round_up(cout, 128))
            w_mat = jnp.pad(w_mat, ((0, 0), (0, cpad - cout))).astype(jnp.bfloat16)
            b = jnp.zeros((1, cpad), jnp.float32)            # synthetic zero bias
            self.params.append((w_mat, b))

    def __call__(self, x_nchw):
        # single NCHW -> NHWC layout change, bf16 activations for the MXU
        x = jnp.transpose(x_nchw, (0, 2, 3, 1)).astype(jnp.bfloat16)
        n = x.shape[0]
        for (cin, cout, stride, _hb, bn, lrelu), (w_mat, b) in zip(self.cfg, self.params):
            patches, oh, ow = im2col_nhwc(x, cin, self.KERNEL, stride, self.PAD)
            m = n * oh * ow
            if bn:
                y = pallas_conv_bn_lrelu(patches, w_mat, out_dtype=jnp.bfloat16)
            else:
                out_dt = jnp.float32 if cout == 1 else jnp.bfloat16
                y = pallas_conv_bias_act(patches, w_mat, b, lrelu=lrelu, out_dtype=out_dt)
            # keep the lane-dense 128-wide activation; the next layer's im2col
            # reads only the first `cout` channels (no separate slice copy).
            x = y[:m].reshape(n, oh, ow, y.shape[1])
        return x[..., :1]   # (N, OH, OW, 1) patch logits, NHWC


# ----------------------------------------------------------------------------
# DualViTokLoss forward (Pallas version)
# ----------------------------------------------------------------------------

class DualViTokLossPallas:
    def __init__(self, disc_start, disc_dim=8, disc_num_layers=3, disc_in_channels=3,
                 disc_weight=1.0, reconstruction_weight=1.0, codebook_weight=1.0,
                 perceptual_weight=1.0, gen_loss_weight=1.0,
                 codebook_enlarge_ratio=0, codebook_enlarge_steps=2000, seed=0):
        self.discriminator = PallasPatchGANDiscriminator(
            jax.random.PRNGKey(seed), input_nc=disc_in_channels,
            ndf=disc_dim, n_layers=disc_num_layers)
        self.discriminator_iter_start = disc_start
        self.disc_weight = disc_weight
        self.rec_weight = reconstruction_weight
        self.codebook_weight = codebook_weight
        self.perceptual_weight = perceptual_weight
        self.gen_loss_weight = gen_loss_weight
        self.codebook_enlarge_ratio = codebook_enlarge_ratio
        self.codebook_enlarge_steps = codebook_enlarge_steps

    def forward(self, codebook_loss, inputs, reconstructions, optimizer_idx, global_step,
                last_layer=None, logger=None, log_every=100):
        disc_weight = adopt_weight(self.disc_weight, global_step,
                                   threshold=self.discriminator_iter_start)
        is_log_step = isinstance(global_step, int) and (global_step % log_every == 0)

        if optimizer_idx == 0:
            logits_fake = self.discriminator(reconstructions)               # NHWC
            # gen_loss_weight is not None and disc_adaptive_weight=False -> weight = 1
            # TODO(synk): calculate_adaptive_weight needs autograd wrt last_layer; not translated.
            disc_adaptive_weight = 1.0
            codebook_w = self.codebook_weight
            if self.codebook_enlarge_ratio > 0:
                codebook_w = codebook_w * (1.0 + self.codebook_enlarge_ratio *
                                           max(0.0, 1.0 - global_step / self.codebook_enlarge_steps))
            loss, rec_loss, gen_adv_loss = pallas_generator_loss(
                codebook_loss, inputs, reconstructions, logits_fake,
                rec_w=self.rec_weight, perc_w=self.perceptual_weight,
                adaptive_w=disc_adaptive_weight, disc_w=disc_weight,
                codebook_w=codebook_w)
            # TODO(synk): LPIPS (pretrained VGG) perceptual loss not translatable; p_loss = 0.
            p_loss = jnp.float32(0.0)
            if is_log_step:   # mirrors the reference: logged dict holds scaled values on log steps
                rec_loss = self.rec_weight * rec_loss
                p_loss = self.perceptual_weight * p_loss
                gen_adv_loss = disc_adaptive_weight * disc_weight * gen_adv_loss
                if logger is not None:
                    logger.info(f"(Generator) rec_loss: {rec_loss}, perceptual_loss: {p_loss}, "
                                f"vq_loss: {codebook_loss}, generator_adv_loss: {gen_adv_loss}")
            loss_dict = {
                'rec_loss': rec_loss,
                'p_loss': p_loss,
                'vq_loss': jnp.asarray(codebook_loss, jnp.float32),
                'generator_adv_loss': gen_adv_loss,
            }
            return loss, loss_dict

        if optimizer_idx == 1:
            # Two independent train-mode discriminator passes, exactly like the reference.
            logits_real_nhwc = self.discriminator(inputs)
            logits_fake_nhwc = self.discriminator(reconstructions)
            # lecam_loss_weight is None -> plain hinge discriminator loss
            # TODO(synk): LeCAM EMA regularizer (lecam_loss_weight) not implemented (default None).
            d_adversarial_loss = pallas_disc_loss(
                logits_real_nhwc, logits_fake_nhwc, disc_w=disc_weight)
            # report logits in NCHW to mirror the PyTorch module's layout
            logits_real = jnp.transpose(logits_real_nhwc, (0, 3, 1, 2))
            logits_fake = jnp.transpose(logits_fake_nhwc, (0, 3, 1, 2))
            if is_log_step:   # mirrors the reference: dict holds the means on log steps
                logits_real = jnp.mean(logits_real)
                logits_fake = jnp.mean(logits_fake)
                if logger is not None:
                    logger.info(f"(Discriminator) discriminator_adv_loss: {d_adversarial_loss}, "
                                f"disc_weight: {disc_weight}, logits_real: {logits_real}, "
                                f"logits_fake: {logits_fake}")
            loss_dict = {
                'discriminator_adv_loss': d_adversarial_loss,
                'logits_real': logits_real,
                'logits_fake': logits_fake,
            }
            return d_adversarial_loss, loss_dict

        raise ValueError(f"bad optimizer_idx {optimizer_idx}")


# ----------------------------------------------------------------------------
# Demo
# ----------------------------------------------------------------------------

if __name__ == "__main__":
    key = jax.random.PRNGKey(0)
    k1, k2, k3 = jax.random.split(key, 3)
    # small shapes: batch=2, channels=3, spatial=32 (>=32 needed for 3-layer PatchGAN)
    inputs = jax.random.normal(k1, (2, 3, 32, 32), jnp.float32)
    reconstructions = inputs + 0.1 * jax.random.normal(k2, (2, 3, 32, 32), jnp.float32)
    codebook_loss = jnp.abs(jax.random.normal(k3, ())).astype(jnp.float32)

    mod = DualViTokLossPallas(disc_start=0, disc_dim=8)

    g_loss, g_dict = mod.forward(codebook_loss, inputs, reconstructions,
                                 optimizer_idx=0, global_step=10)
    d_loss, d_dict = mod.forward(codebook_loss, inputs, reconstructions,
                                 optimizer_idx=1, global_step=10)

    jax.block_until_ready((g_loss, d_loss, g_dict, d_dict))
    print("KERNEL_OK")
</pallas_src>

<mosaic_0001>
module attributes {stable_mosaic.version = 11 : i64} {
  func.func @_mm_bias_act_kernel(%arg0: i32, %arg1: memref<512x48xbf16, #tpu.memory_space<vmem>>, %arg2: memref<48x128xbf16, #tpu.memory_space<vmem>>, %arg3: memref<1x128xf32, #tpu.memory_space<vmem>>, %arg4: memref<512x128xbf16, #tpu.memory_space<vmem>>) attributes {dimension_semantics = [#tpu.dimension_semantics<parallel>], iteration_bounds = array<i64: 1>, scalar_prefetch = 0 : i64, scratch_operands = 0 : i64, tpu.core_type = #tpu.core_type<tc>, window_params = [{transform_indices = @transform_0, window_bounds = array<i64: 512, 48>}, {pipeline_mode = #tpu.pipeline_mode<synchronous>, transform_indices = @transform_1, window_bounds = array<i64: 48, 128>}, {pipeline_mode = #tpu.pipeline_mode<synchronous>, transform_indices = @transform_2, window_bounds = array<i64: 1, 128>}, {transform_indices = @transform_3, window_bounds = array<i64: 512, 128>}]} {
    %c0 = arith.constant 0 : index
    %c0_0 = arith.constant 0 : index
    %0 = vector.load %arg1[%c0, %c0_0] : memref<512x48xbf16, #tpu.memory_space<vmem>>, vector<512x48xbf16>
    %c0_1 = arith.constant 0 : index
    %c0_2 = arith.constant 0 : index
    %1 = vector.load %arg2[%c0_1, %c0_2] : memref<48x128xbf16, #tpu.memory_space<vmem>>, vector<48x128xbf16>
    %cst = arith.constant dense<0.000000e+00> : vector<512x128xf32>
    %2 = tpu.matmul %0, %1, %cst {dimension_numbers = #tpu.dot_dimension_numbers<[1], [0], [0], [1], [0, 0, 1, 1], [], []>} : vector<512x48xbf16>, vector<48x128xbf16>, vector<512x128xf32> -> vector<512x128xf32>
    %c0_3 = arith.constant 0 : index
    %c0_4 = arith.constant 0 : index
    %3 = vector.load %arg3[%c0_3, %c0_4] : memref<1x128xf32, #tpu.memory_space<vmem>>, vector<1x128xf32>
    %4 = vector.broadcast %3 : vector<1x128xf32> to vector<512x128xf32>
    %5 = arith.addf %2, %4 : vector<512x128xf32>
    %cst_5 = arith.constant 0.000000e+00 : f32
    %6 = vector.broadcast %cst_5 : f32 to vector<512x128xf32>
    %7 = arith.cmpf ogt, %5, %6 : vector<512x128xf32>
    %cst_6 = arith.constant 2.000000e-01 : f32
    %8 = vector.broadcast %cst_6 : f32 to vector<512x128xf32>
    %9 = arith.mulf %8, %5 : vector<512x128xf32>
    %10 = arith.select %7, %5, %9 : vector<512x128xi1>, vector<512x128xf32>
    %11 = arith.truncf %10 : vector<512x128xf32> to vector<512x128xbf16>
    %c0_7 = arith.constant 0 : index
    %c0_8 = arith.constant 0 : index
    %12 = vector.load %arg4[%c0_7, %c0_8] : memref<512x128xbf16, #tpu.memory_space<vmem>>, vector<512x128xbf16>
    tpu.vector_store %arg4[%c0_7, %c0_8], %11 {strides = array<i32>} : memref<512x128xbf16, #tpu.memory_space<vmem>>, vector<512x128xbf16>,
    return
  }
  func.func @transform_0(%arg0: i32) -> (i32, i32) {
    %c0_i32 = arith.constant 0 : i32
    %c0_i32_0 = arith.constant 0 : i32
    return %arg0, %c0_i32 : i32, i32
  }
  func.func @transform_1(%arg0: i32) -> (i32, i32) {
    %c0_i32 = arith.constant 0 : i32
    %c0_i32_0 = arith.constant 0 : i32
    %c0_i32_1 = arith.constant 0 : i32
    return %c0_i32, %c0_i32_0 : i32, i32
  }
  func.func @transform_2(%arg0: i32) -> (i32, i32) {
    %c0_i32 = arith.constant 0 : i32
    %c0_i32_0 = arith.constant 0 : i32
    %c0_i32_1 = arith.constant 0 : i32
    return %c0_i32, %c0_i32_0 : i32, i32
  }
  func.func @transform_3(%arg0: i32) -> (i32, i32) {
    %c0_i32 = arith.constant 0 : i32
    %c0_i32_0 = arith.constant 0 : i32
    return %arg0, %c0_i32 : i32, i32
  }
}

</mosaic_0001>

<llo_original>
// kernel: tpu_custom_call.1
$region0: #{tpu_custom_call.1}
  #allocation0 [shape = 'u32[]', space=smem, size = 0x4, offset = 0x4, fixed_abs, tag = 'smem constant byte address 0x4 - core index']
  #allocation1 [shape = 'u32[144,128]{1,0:T(1,128)}', space=vmem, size = 0x12000, scoped, tag = 'internal scratch']
  %s0 = inlined_call_operand.vmem [shape: bf16[512,48], index: 0, kind: input, shape index: {}]
  %s1 = inlined_call_operand.vmem [shape: bf16[48,128], index: 1, kind: input, shape index: {}]
  %s2 = inlined_call_operand.vmem [shape: f32[1,128], index: 2, kind: input, shape index: {}]
  %s3 = inlined_call_operand.hbm [shape: bf16[512,128], index: 3, kind: output, shape index: {}]
  %s4 = sld [smem:[#allocation0]]
  $region22: #{tpu_custom_call.1} parent=0
    _
  %s6 = ssub.s32 1, %s4
  %s7 = scalar_select 0, %s6, %s4
  $region1: #{tpu_custom_call.1} parent=0
    #allocation2 [shape = 'u8[131072]{0}', space=vmem, size = 0x20000, scoped, tag = 'output window, operand 0, single buffered']
    #allocation3 [shape = 's32[1]{0}', space=sflag, size = 0x4, scoped, tag = 'scoped memory for tpu_custom_call.1']
    %8 = vsyncpa [#allocation3], 0
    // Predicated region
    $region2: #{tpu_custom_call.1} parent=1 // pred_check
      _
    $region3: #{tpu_custom_call.1} parent=1 // pred_check_branch
      %10 = sbr.rel (0) target = $region5
    $region4: #{tpu_custom_call.1} parent=1 // pred_region
      _
    $region5: #{tpu_custom_call.1} parent=1 // pred_fallthru
      _
    // Predicated region
    $region6: #{tpu_custom_call.1} parent=1 // pred_check
      _
    $region7: #{tpu_custom_call.1} parent=1 // pred_check_branch
      %12 = sbr.rel (0) target = $region9
    $region8: #{tpu_custom_call.1} parent=1 // pred_region
      _
    $region9: #{tpu_custom_call.1} parent=1 // pred_fallthru
      _
    // Predicated region
    $region10: #{tpu_custom_call.1} parent=1 // pred_check
      _
    $region11: #{tpu_custom_call.1} parent=1 // pred_check_branch
      %14 = sbr.rel (0) target = $region13
    $region12: #{tpu_custom_call.1} parent=1 // pred_region
      _
    $region13: #{tpu_custom_call.1} parent=1 // pred_fallthru
      _
    %v16 = vld [vmem:[%s0] sm:$0xf]
    %v17 = vld [vmem:[%s0 + $0x4] sm:$0xf]
    %v18 = vld [vmem:[%s0 + $0x8] sm:$0xf]
    %v19 = vld [vmem:[%s0 + $0xc] sm:$0xf]
    %v20 = vld [vmem:[%s0 + $0x10] sm:$0xf]
    %v21 = vld [vmem:[%s0 + $0x14] sm:$0xf]
    %v22 = vld [vmem:[%s0 + $0x18] sm:$0xf]
    %v23 = vld [vmem:[%s0 + $0x1c] sm:$0xf]
    %v24 = vld [vmem:[%s0 + $0x20] sm:$0xf]
    %v25 = vld [vmem:[%s0 + $0x24] sm:$0xf]
    %v26 = vld [vmem:[%s0 + $0x28] sm:$0xf]
    %v27 = vld [vmem:[%s0 + $0x2c] sm:$0xf]
    %v28 = vld [vmem:[%s0 + $0x30] sm:$0xf]
    %v29 = vld [vmem:[%s0 + $0x34] sm:$0xf]
    %v30 = vld [vmem:[%s0 + $0x38] sm:$0xf]
    %v31 = vld [vmem:[%s0 + $0x3c] sm:$0xf]
    %v32 = vld [vmem:[%s0 + $0x40] sm:$0xf]
    %v33 = vld [vmem:[%s0 + $0x44] sm:$0xf]
    %v34 = vld [vmem:[%s0 + $0x48] sm:$0xf]
    %v35 = vld [vmem:[%s0 + $0x4c] sm:$0xf]
    %v36 = vld [vmem:[%s0 + $0x50] sm:$0xf]
    %v37 = vld [vmem:[%s0 + $0x54] sm:$0xf]
    %v38 = vld [vmem:[%s0 + $0x58] sm:$0xf]
    %v39 = vld [vmem:[%s0 + $0x5c] sm:$0xf]
    %v40 = vld [vmem:[%s0 + $0x60] sm:$0xf]
    %v41 = vld [vmem:[%s0 + $0x64] sm:$0xf]
    %v42 = vld [vmem:[%s0 + $0x68] sm:$0xf]
    %v43 = vld [vmem:[%s0 + $0x6c] sm:$0xf]
    %v44 = vld [vmem:[%s0 + $0x70] sm:$0xf]
    %v45 = vld [vmem:[%s0 + $0x74] sm:$0xf]
    %v46 = vld [vmem:[%s0 + $0x78] sm:$0xf]
    %v47 = vld [vmem:[%s0 + $0x7c] sm:$0xf]
    %v48 = vld [vmem:[%s0 + $0x80] sm:$0xf]
    %v49 = vld [vmem:[%s0 + $0x84] sm:$0xf]
    %v50 = vld [vmem:[%s0 + $0x88] sm:$0xf]
    %v51 = vld [vmem:[%s0 + $0x8c] sm:$0xf]
    %v52 = vld [vmem:[%s0 + $0x90] sm:$0xf]
    %v53 = vld [vmem:[%s0 + $0x94] sm:$0xf]
    %v54 = vld [vmem:[%s0 + $0x98] sm:$0xf]
    %v55 = vld [vmem:[%s0 + $0x9c] sm:$0xf]
    %v56 = vld [vmem:[%s0 + $0xa0] sm:$0xf]
    %v57 = vld [vmem:[%s0 + $0xa4] sm:$0xf]
    %v58 = vld [vmem:[%s0 + $0xa8] sm:$0xf]
    %v59 = vld [vmem:[%s0 + $0xac] sm:$0xf]
    %v60 = vld [vmem:[%s0 + $0xb0] sm:$0xf]
    %v61 = vld [vmem:[%s0 + $0xb4] sm:$0xf]
    %v62 = vld [vmem:[%s0 + $0xb8] sm:$0xf]
    %v63 = vld [vmem:[%s0 + $0xbc] sm:$0xf]
    %v64 = vld [vmem:[%s0 + $0xc0] sm:$0xf]
    %v65 = vld [vmem:[%s0 + $0xc4] sm:$0xf]
    %v66 = vld [vmem:[%s0 + $0xc8] sm:$0xf]
    %v67 = vld [vmem:[%s0 + $0xcc] sm:$0xf]
    %v68 = vld [vmem:[%s0 + $0xd0] sm:$0xf]
    %v69 = vld [vmem:[%s0 + $0xd4] sm:$0xf]
    %v70 = vld [vmem:[%s0 + $0xd8] sm:$0xf]
    %v71 = vld [vmem:[%s0 + $0xdc] sm:$0xf]
    %v72 = vld [vmem:[%s0 + $0xe0] sm:$0xf]
    %v73 = vld [vmem:[%s0 + $0xe4] sm:$0xf]
    %v74 = vld [vmem:[%s0 + $0xe8] sm:$0xf]
    %v75 = vld [vmem:[%s0 + $0xec] sm:$0xf]
    %v76 = vld [vmem:[%s0 + $0xf0] sm:$0xf]
    %v77 = vld [vmem:[%s0 + $0xf4] sm:$0xf]
    %v78 = vld [vmem:[%s0 + $0xf8] sm:$0xf]
    %v79 = vld [vmem:[%s0 + $0xfc] sm:$0xf]
    %v80 = vld [vmem:[%s1] sm:$0xf]
    %v81 = vld [vmem:[%s1 + $0x4] sm:$0xf]
    %v82 = vld [vmem:[%s1 + $0x8] sm:$0xf]
    %v83 = vld [vmem:[%s1 + $0xc] sm:$0xf]
    %v84 = vld [vmem:[%s1 + $0x10] sm:$0xf]
    %v85 = vld [vmem:[%s1 + $0x14] sm:$0xf]
    %v86 = vld [vmem:[%s2] sm:$0x1]
    %v88 = vlaneseq
    %v89 = vshrl.u32 %v88, 7
    %v90 = vsub.s32 0, %v89
    %v91 = vrot.slane %v86, %v90
    %v157 = vunpack.c.l.b16 %v16
    %v158 = vunpack.c.l.b16 %v17
    %v159 = vunpack.c.l.b16 %v18
    %v160 = vunpack.c.l.b16 %v19
    %v161 = vunpack.c.l.b16 %v20
    %v162 = vunpack.c.l.b16 %v21
    %v163 = vunpack.c.l.b16 %v22
    %v164 = vunpack.c.l.b16 %v23
    %v165 = vunpack.c.l.b16 %v24
    %v166 = vunpack.c.l.b16 %v25
    %v167 = vunpack.c.l.b16 %v26
    %v168 = vunpack.c.l.b16 %v27
    %v169 = vunpack.c.l.b16 %v28
    %v170 = vunpack.c.l.b16 %v29
    %v171 = vunpack.c.l.b16 %v30
    %v172 = vunpack.c.l.b16 %v31
    %v173 = vunpack.c.l.b16 %v32
    %v174 = vunpack.c.l.b16 %v33
    %v175 = vunpack.c.l.b16 %v34
    %v176 = vunpack.c.l.b16 %v35
    %v177 = vunpack.c.l.b16 %v36
    %v178 = vunpack.c.l.b16 %v37
    %v179 = vunpack.c.l.b16 %v38
    %v180 = vunpack.c.l.b16 %v39
    %v181 = vunpack.c.l.b16 %v40
    %v182 = vunpack.c.l.b16 %v41
    %v183 = vunpack.c.l.b16 %v42
    %v184 = vunpack.c.l.b16 %v43
    %v185 = vunpack.c.l.b16 %v44
    %v186 = vunpack.c.l.b16 %v45
    %v187 = vunpack.c.l.b16 %v46
    %v188 = vunpack.c.l.b16 %v47
    %v189 = vunpack.c.l.b16 %v48
    %v190 = vunpack.c.l.b16 %v49
    %v191 = vunpack.c.l.b16 %v50
    %v192 = vunpack.c.l.b16 %v51
    %v193 = vunpack.c.l.b16 %v52
    %v194 = vunpack.c.l.b16 %v53
    %v195 = vunpack.c.l.b16 %v54
    %v196 = vunpack.c.l.b16 %v55
    %v197 = vunpack.c.l.b16 %v56
    %v198 = vunpack.c.l.b16 %v57
    %v199 = vunpack.c.l.b16 %v58
    %v200 = vunpack.c.l.b16 %v59
    %v201 = vunpack.c.l.b16 %v60
    %v202 = vunpack.c.l.b16 %v61
    %v203 = vunpack.c.l.b16 %v62
    %v204 = vunpack.c.l.b16 %v63
    %v205 = vunpack.c.l.b16 %v64
    %v206 = vunpack.c.l.b16 %v65
    %v207 = vunpack.c.l.b16 %v66
    %v208 = vunpack.c.l.b16 %v67
    %v209 = vunpack.c.l.b16 %v68
    %v210 = vunpack.c.l.b16 %v69
    %v211 = vunpack.c.l.b16 %v70
    %v212 = vunpack.c.l.b16 %v71
    %v213 = vunpack.c.l.b16 %v72
    %v214 = vunpack.c.l.b16 %v73
    %v215 = vunpack.c.l.b16 %v74
    %v216 = vunpack.c.l.b16 %v75
    %v217 = vunpack.c.l.b16 %v76
    %v218 = vunpack.c.l.b16 %v77
    %v219 = vunpack.c.l.b16 %v78
    %v220 = vunpack.c.l.b16 %v79
    %v221 = vpack.c.b16 %v158, %v157
    %v222 = vpack.c.b16 %v160, %v159
    %v223 = vpack.c.b16 %v162, %v161
    %v224 = vpack.c.b16 %v164, %v163
    %v225 = vpack.c.b16 %v166, %v165
    %v226 = vpack.c.b16 %v168, %v167
    %v227 = vpack.c.b16 %v170, %v169
    %v228 = vpack.c.b16 %v172, %v171
    %v229 = vpack.c.b16 %v174, %v173
    %v230 = vpack.c.b16 %v176, %v175
    %v231 = vpack.c.b16 %v178, %v177
    %v232 = vpack.c.b16 %v180, %v179
    %v233 = vpack.c.b16 %v182, %v181
    %v234 = vpack.c.b16 %v184, %v183
    %v235 = vpack.c.b16 %v186, %v185
    %v236 = vpack.c.b16 %v188, %v187
    %v237 = vpack.c.b16 %v190, %v189
    %v238 = vpack.c.b16 %v192, %v191
    %v239 = vpack.c.b16 %v194, %v193
    %v240 = vpack.c.b16 %v196, %v195
    %v241 = vpack.c.b16 %v198, %v197
    %v242 = vpack.c.b16 %v200, %v199
    %v243 = vpack.c.b16 %v202, %v201
    %v244 = vpack.c.b16 %v204, %v203
    %v245 = vpack.c.b16 %v206, %v205
    %v246 = vpack.c.b16 %v208, %v207
    %v247 = vpack.c.b16 %v210, %v209
    %v248 = vpack.c.b16 %v212, %v211
    %v249 = vpack.c.b16 %v214, %v213
    %v250 = vpack.c.b16 %v216, %v215
    %v251 = vpack.c.b16 %v218, %v217
    %v252 = vpack.c.b16 %v220, %v219
    %v259 = vunpack.c.l.b16 %v80
    %v260 = vunpack.c.l.b16 %v81
    %v261 = vunpack.c.l.b16 %v82
    %v262 = vunpack.c.l.b16 %v83
    %v263 = vunpack.c.l.b16 %v84
    %v264 = vunpack.c.l.b16 %v85
    %v265 = vpack.c.b16 %v260, %v259
    %v266 = vpack.c.b16 %v262, %v261
    %v267 = vpack.c.b16 %v264, %v263
    %vm271 = vcmask 392192
    %v273 = vsel %vm271, %v221, 0
    %v276 = vsel %vm271, %v222, 0
    %v279 = vsel %vm271, %v223, 0
    %v282 = vsel %vm271, %v224, 0
    %v285 = vsel %vm271, %v225, 0
    %v288 = vsel %vm271, %v226, 0
    %v291 = vsel %vm271, %v227, 0
    %v294 = vsel %vm271, %v228, 0
    %v297 = vsel %vm271, %v229, 0
    %v300 = vsel %vm271, %v230, 0
    %v303 = vsel %vm271, %v231, 0
    %v306 = vsel %vm271, %v232, 0
    %v309 = vsel %vm271, %v233, 0
    %v312 = vsel %vm271, %v234, 0
    %v315 = vsel %vm271, %v235, 0
    %v318 = vsel %vm271, %v236, 0
    %v321 = vsel %vm271, %v237, 0
    %v324 = vsel %vm271, %v238, 0
    %v327 = vsel %vm271, %v239, 0
    %v330 = vsel %vm271, %v240, 0
    %v333 = vsel %vm271, %v241, 0
    %v336 = vsel %vm271, %v242, 0
    %v339 = vsel %vm271, %v243, 0
    %v342 = vsel %vm271, %v244, 0
    %v345 = vsel %vm271, %v245, 0
    %v348 = vsel %vm271, %v246, 0
    %v351 = vsel %vm271, %v247, 0
    %v354 = vsel %vm271, %v248, 0
    %v357 = vsel %vm271, %v249, 0
    %v360 = vsel %vm271, %v250, 0
    %v363 = vsel %vm271, %v251, 0
    %v366 = vsel %vm271, %v252, 0
    %368 = vmatprep.subr.bf16.mxu0 0
    %369 = vmatpush1.bf16.msra.mxu0 %v265
    %370 = vmatprep.subr.bf16.mxu0 0
    %371 = vmatpush1.bf16.msra.mxu0 %v266
    %372 = vmatprep.subr.bf16.mxu0 0
    %373 = vmatpush1.bf16.msra.mxu0 %v267
    %374 = vmatprep.subr.bf16.mxu0 0
    %375 = vmatpush1.bf16.msra.mxu0 0
    %376 = vmatprep.subr.bf16.mxu0 0
    %377 = vmatpush1.bf16.msra.mxu0 0
    %378 = vmatprep.subr.bf16.mxu0 0
    %379 = vmatpush1.bf16.msra.mxu0 0
    %380 = vmatprep.subr.bf16.mxu0 0
    %381 = vmatpush1.bf16.msra.mxu0 0
    %382 = vmatprep.subr.bf16.mxu0 0
    %383 = vmatpush1.bf16.msra.mxu0 0
    %384 = vmatprep.subr.bf16.mxu0 0
    %385 = vmatpush1.bf16.msra.mxu0 0
    %386 = vmatprep.subr.bf16.mxu0 0
    %387 = vmatpush1.bf16.msra.mxu0 0
    %388 = vmatprep.subr.bf16.mxu0 0
    %389 = vmatpush1.bf16.msra.mxu0 0
    %390 = vmatprep.subr.bf16.mxu0 0
    %391 = vmatpush1.bf16.msra.mxu0 0
    %392 = vmatprep.subr.bf16.mxu0 0
    %393 = vmatpush1.bf16.msra.mxu0 0
    %394 = vmatprep.subr.bf16.mxu0 0
    %395 = vmatpush1.bf16.msra.mxu0 0
    %396 = vmatprep.subr.bf16.mxu0 0
    %397 = vmatpush1.bf16.msra.mxu0 0
    %398 = vmatprep.subr.bf16.mxu0 0
    %399 = vmatpush1.bf16.msra.mxu0 0
    %400 = vmatprep.mubr.bf16.mxu0 0
    %401 = vmatmul.mubr.bf16.gmra.mrb[0].mxu0 %v273
    %v402 = vpop.f32.mrb[0].mxu0
    %v403 = vadd.f32 %v91, %v402
    %v404 = vpop.f32.mrb[0].mxu0
    %v405 = vpop.f32.mrb[0].mxu0
    %v406 = vadd.f32 %v91, %v405
    %v407 = vpop.f32.mrb[0].mxu0
    %408 = vmatprep.mubr.bf16.mxu0 0
    %409 = vmatmul.mubr.bf16.gmra.mrb[0].mxu0 %v276
    %v410 = vpop.f32.mrb[0].mxu0
    %v411 = vadd.f32 %v91, %v410
    %v412 = vpop.f32.mrb[0].mxu0
    %v413 = vpop.f32.mrb[0].mxu0
    %v414 = vadd.f32 %v91, %v413
    %v415 = vpop.f32.mrb[0].mxu0
    %416 = vmatprep.mubr.bf16.mxu0 0
    %417 = vmatmul.mubr.bf16.gmra.mrb[0].mxu0 %v279
    %v418 = vpop.f32.mrb[0].mxu0
    %v419 = vadd.f32 %v91, %v418
    %v420 = vpop.f32.mrb[0].mxu0
    %v421 = vpop.f32.mrb[0].mxu0
    %v422 = vadd.f32 %v91, %v421
    %v423 = vpop.f32.mrb[0].mxu0
    %424 = vmatprep.mubr.bf16.mxu0 0
    %425 = vmatmul.mubr.bf16.gmra.mrb[0].mxu0 %v282
    %v426 = vpop.f32.mrb[0].mxu0
    %v427 = vadd.f32 %v91, %v426
    %v428 = vpop.f32.mrb[0].mxu0
    %v429 = vpop.f32.mrb[0].mxu0
    %v430 = vadd.f32 %v91, %v429
    %v431 = vpop.f32.mrb[0].mxu0
    %432 = vmatprep.mubr.bf16.mxu0 0
    %433 = vmatmul.mubr.bf16.gmra.mrb[0].mxu0 %v285
    %v434 = vpop.f32.mrb[0].mxu0
    %v435 = vadd.f32 %v91, %v434
    %v436 = vpop.f32.mrb[0].mxu0
    %v437 = vpop.f32.mrb[0].mxu0
    %v438 = vadd.f32 %v91, %v437
    %v439 = vpop.f32.mrb[0].mxu0
    %440 = vmatprep.mubr.bf16.mxu0 0
    %441 = vmatmul.mubr.bf16.gmra.mrb[0].mxu0 %v288
    %v442 = vpop.f32.mrb[0].mxu0
    %v443 = vadd.f32 %v91, %v442
    %v444 = vpop.f32.mrb[0].mxu0
    %v445 = vpop.f32.mrb[0].mxu0
    %v446 = vadd.f32 %v91, %v445
    %v447 = vpop.f32.mrb[0].mxu0
    %448 = vmatprep.mubr.bf16.mxu0 0
    %449 = vmatmul.mubr.bf16.gmra.mrb[0].mxu0 %v291
    %v450 = vpop.f32.mrb[0].mxu0
    %v451 = vadd.f32 %v91, %v450
    %v452 = vpop.f32.mrb[0].mxu0
    %v453 = vpop.f32.mrb[0].mxu0
    %v454 = vadd.f32 %v91, %v453
    %v455 = vpop.f32.mrb[0].mxu0
    %456 = vmatprep.mubr.bf16.mxu0 0
    %457 = vmatmul.mubr.bf16.gmra.mrb[0].mxu0 %v294
    %v458 = vpop.f32.mrb[0].mxu0
    %v459 = vadd.f32 %v91, %v458
    %v460 = vpop.f32.mrb[0].mxu0
    %v461 = vpop.f32.mrb[0].mxu0
    %v462 = vadd.f32 %v91, %v461
    %v463 = vpop.f32.mrb[0].mxu0
    %464 = vmatprep.mubr.bf16.mxu0 0
    %465 = vmatmul.mubr.bf16.gmra.mrb[0].mxu0 %v297
    %v466 = vpop.f32.mrb[0].mxu0
    %v467 = vadd.f32 %v91, %v466
    %v468 = vpop.f32.mrb[0].mxu0
    %v469 = vpop.f32.mrb[0].mxu0
    %v470 = vadd.f32 %v91, %v469
    %v471 = vpop.f32.mrb[0].mxu0
    %472 = vmatprep.mubr.bf16.mxu0 0
    %473 = vmatmul.mubr.bf16.gmra.mrb[0].mxu0 %v300
    %v474 = vpop.f32.mrb[0].mxu0
    %v475 = vadd.f32 %v91, %v474
    %v476 = vpop.f32.mrb[0].mxu0
    %v477 = vpop.f32.mrb[0].mxu0
    %v478 = vadd.f32 %v91, %v477
    %v479 = vpop.f32.mrb[0].mxu0
    %480 = vmatprep.mubr.bf16.mxu0 0
    %481 = vmatmul.mubr.bf16.gmra.mrb[0].mxu0 %v303
    %v482 = vpop.f32.mrb[0].mxu0
    %v483 = vadd.f32 %v91, %v482
    %v484 = vpop.f32.mrb[0].mxu0
    %v485 = vpop.f32.mrb[0].mxu0
    %v486 = vadd.f32 %v91, %v485
    %v487 = vpop.f32.mrb[0].mxu0
    %488 = vmatprep.mubr.bf16.mxu0 0
    %489 = vmatmul.mubr.bf16.gmra.mrb[0].mxu0 %v306
    %v490 = vpop.f32.mrb[0].mxu0
    %v491 = vadd.f32 %v91, %v490
    %v492 = vpop.f32.mrb[0].mxu0
    %v493 = vpop.f32.mrb[0].mxu0
    %v494 = vadd.f32 %v91, %v493
    %v495 = vpop.f32.mrb[0].mxu0
    %496 = vmatprep.mubr.bf16.mxu0 0
    %497 = vmatmul.mubr.bf16.gmra.mrb[0].mxu0 %v309
    %v498 = vpop.f32.mrb[0].mxu0
    %v499 = vadd.f32 %v91, %v498
    %v500 = vpop.f32.mrb[0].mxu0
    %v501 = vpop.f32.mrb[0].mxu0
    %v502 = vadd.f32 %v91, %v501
    %v503 = vpop.f32.mrb[0].mxu0
    %504 = vmatprep.mubr.bf16.mxu0 0
    %505 = vmatmul.mubr.bf16.gmra.mrb[0].mxu0 %v312
    %v506 = vpop.f32.mrb[0].mxu0
    %v507 = vadd.f32 %v91, %v506
    %v508 = vpop.f32.mrb[0].mxu0
    %v509 = vpop.f32.mrb[0].mxu0
    %v510 = vadd.f32 %v91, %v509
    %v511 = vpop.f32.mrb[0].mxu0
    %512 = vmatprep.mubr.bf16.mxu0 0
    %513 = vmatmul.mubr.bf16.gmra.mrb[0].mxu0 %v315
    %v514 = vpop.f32.mrb[0].mxu0
    %v515 = vadd.f32 %v91, %v514
    %v516 = vpop.f32.mrb[0].mxu0
    %v517 = vpop.f32.mrb[0].mxu0
    %v518 = vadd.f32 %v91, %v517
    %v519 = vpop.f32.mrb[0].mxu0
    %520 = vmatprep.mubr.bf16.mxu0 0
    %521 = vmatmul.mubr.bf16.gmra.mrb[0].mxu0 %v318
    %v522 = vpop.f32.mrb[0].mxu0
    %v523 = vadd.f32 %v91, %v522
    %v524 = vpop.f32.mrb[0].mxu0
    %v525 = vpop.f32.mrb[0].mxu0
    %v526 = vadd.f32 %v91, %v525
    %v527 = vpop.f32.mrb[0].mxu0
    %528 = vmatprep.mubr.bf16.mxu0 0
    %529 = vmatmul.mubr.bf16.gmra.mrb[0].mxu0 %v321
    %v530 = vpop.f32.mrb[0].mxu0
    %v531 = vadd.f32 %v91, %v530
    %v532 = vpop.f32.mrb[0].mxu0
    %v533 = vpop.f32.mrb[0].mxu0
    %v534 = vadd.f32 %v91, %v533
    %v535 = vpop.f32.mrb[0].mxu0
    %536 = vmatprep.mubr.bf16.mxu0 0
    %537 = vmatmul.mubr.bf16.gmra.mrb[0].mxu0 %v324
    %v538 = vpop.f32.mrb[0].mxu0
    %v539 = vadd.f32 %v91, %v538
    %v540 = vpop.f32.mrb[0].mxu0
    %v541 = vpop.f32.mrb[0].mxu0
    %v542 = vadd.f32 %v91, %v541
    %v543 = vpop.f32.mrb[0].mxu0
    %544 = vmatprep.mubr.bf16.mxu0 0
    %545 = vmatmul.mubr.bf16.gmra.mrb[0].mxu0 %v327
    %v546 = vpop.f32.mrb[0].mxu0
    %v547 = vadd.f32 %v91, %v546
    %v548 = vpop.f32.mrb[0].mxu0
    %v549 = vpop.f32.mrb[0].mxu0
    %v550 = vadd.f32 %v91, %v549
    %v551 = vpop.f32.mrb[0].mxu0
    %552 = vmatprep.mubr.bf16.mxu0 0
    %553 = vmatmul.mubr.bf16.gmra.mrb[0].mxu0 %v330
    %v554 = vpop.f32.mrb[0].mxu0
    %v555 = vadd.f32 %v91, %v554
    %v556 = vpop.f32.mrb[0].mxu0
    %v557 = vpop.f32.mrb[0].mxu0
    %v558 = vadd.f32 %v91, %v557
    %v559 = vpop.f32.mrb[0].mxu0
    %560 = vmatprep.mubr.bf16.mxu0 0
    %561 = vmatmul.mubr.bf16.gmra.mrb[0].mxu0 %v333
    %v562 = vpop.f32.mrb[0].mxu0
    %v563 = vadd.f32 %v91, %v562
    %v564 = vpop.f32.mrb[0].mxu0
    %v565 = vpop.f32.mrb[0].mxu0
    %v566 = vadd.f32 %v91, %v565
    %v567 = vpop.f32.mrb[0].mxu0
    %568 = vmatprep.mubr.bf16.mxu0 0
    %569 = vmatmul.mubr.bf16.gmra.mrb[0].mxu0 %v336
    %v570 = vpop.f32.mrb[0].mxu0
    %v571 = vadd.f32 %v91, %v570
    %v572 = vpop.f32.mrb[0].mxu0
    %v573 = vpop.f32.mrb[0].mxu0
    %v574 = vadd.f32 %v91, %v573
    %v575 = vpop.f32.mrb[0].mxu0
    %576 = vmatprep.mubr.bf16.mxu0 0
    %577 = vmatmul.mubr.bf16.gmra.mrb[0].mxu0 %v339
    %v578 = vpop.f32.mrb[0].mxu0
    %v579 = vadd.f32 %v91, %v578
    %v580 = vpop.f32.mrb[0].mxu0
    %v581 = vpop.f32.mrb[0].mxu0
    %v582 = vadd.f32 %v91, %v581
    %v583 = vpop.f32.mrb[0].mxu0
    %584 = vmatprep.mubr.bf16.mxu0 0
    %585 = vmatmul.mubr.bf16.gmra.mrb[0].mxu0 %v342
    %v586 = vpop.f32.mrb[0].mxu0
    %v587 = vadd.f32 %v91, %v586
    %v588 = vpop.f32.mrb[0].mxu0
    %v589 = vpop.f32.mrb[0].mxu0
    %v590 = vadd.f32 %v91, %v589
    %v591 = vpop.f32.mrb[0].mxu0
    %592 = vmatprep.mubr.bf16.mxu0 0
    %593 = vmatmul.mubr.bf16.gmra.mrb[0].mxu0 %v345
    %v594 = vpop.f32.mrb[0].mxu0
    %v595 = vadd.f32 %v91, %v594
    %v596 = vpop.f32.mrb[0].mxu0
    %v597 = vpop.f32.mrb[0].mxu0
    %v598 = vadd.f32 %v91, %v597
    %v599 = vpop.f32.mrb[0].mxu0
    %600 = vmatprep.mubr.bf16.mxu0 0
    %601 = vmatmul.mubr.bf16.gmra.mrb[0].mxu0 %v348
    %v602 = vpop.f32.mrb[0].mxu0
    %v603 = vadd.f32 %v91, %v602
    %v604 = vpop.f32.mrb[0].mxu0
    %v605 = vpop.f32.mrb[0].mxu0
    %v606 = vadd.f32 %v91, %v605
    %v607 = vpop.f32.mrb[0].mxu0
    %608 = vmatprep.mubr.bf16.mxu0 0
    %609 = vmatmul.mubr.bf16.gmra.mrb[0].mxu0 %v351
    %v610 = vpop.f32.mrb[0].mxu0
    %v611 = vadd.f32 %v91, %v610
    %v612 = vpop.f32.mrb[0].mxu0
    %v613 = vpop.f32.mrb[0].mxu0
    %v614 = vadd.f32 %v91, %v613
    %v615 = vpop.f32.mrb[0].mxu0
    %616 = vmatprep.mubr.bf16.mxu0 0
    %617 = vmatmul.mubr.bf16.gmra.mrb[0].mxu0 %v354
    %v618 = vpop.f32.mrb[0].mxu0
    %v619 = vadd.f32 %v91, %v618
    %v620 = vpop.f32.mrb[0].mxu0
    %v621 = vpop.f32.mrb[0].mxu0
    %v622 = vadd.f32 %v91, %v621
    %v623 = vpop.f32.mrb[0].mxu0
    %624 = vmatprep.mubr.bf16.mxu0 0
    %625 = vmatmul.mubr.bf16.gmra.mrb[0].mxu0 %v357
    %v626 = vpop.f32.mrb[0].mxu0
    %v627 = vadd.f32 %v91, %v626
    %v628 = vpop.f32.mrb[0].mxu0
    %v629 = vpop.f32.mrb[0].mxu0
    %v630 = vadd.f32 %v91, %v629
    %v631 = vpop.f32.mrb[0].mxu0
    %632 = vmatprep.mubr.bf16.mxu0 0
    %633 = vmatmul.mubr.bf16.gmra.mrb[0].mxu0 %v360
    %v634 = vpop.f32.mrb[0].mxu0
    %v635 = vadd.f32 %v91, %v634
    %v636 = vpop.f32.mrb[0].mxu0
    %v637 = vpop.f32.mrb[0].mxu0
    %v638 = vadd.f32 %v91, %v637
    %v639 = vpop.f32.mrb[0].mxu0
    %640 = vmatprep.mubr.bf16.mxu0 0
    %641 = vmatmul.mubr.bf16.gmra.mrb[0].mxu0 %v363
    %v642 = vpop.f32.mrb[0].mxu0
    %v643 = vadd.f32 %v91, %v642
    %v644 = vpop.f32.mrb[0].mxu0
    %v645 = vpop.f32.mrb[0].mxu0
    %v646 = vadd.f32 %v91, %v645
    %v647 = vpop.f32.mrb[0].mxu0
    %648 = vmatprep.mubr.bf16.mxu0 0
    %649 = vmatmul.mubr.bf16.gmra.mrb[0].mxu0 %v366
    %v650 = vpop.f32.mrb[0].mxu0
    %v651 = vadd.f32 %v91, %v650
    %v652 = vpop.f32.mrb[0].mxu0
    %v653 = vpop.f32.mrb[0].mxu0
    %v654 = vadd.f32 %v91, %v653
    %v655 = vpop.f32.mrb[0].mxu0
    %656 = vdwg.mxu0
    %vm657 = vcmp.gt.f32.partialorder %v403, 0.0
    %vm658 = vcmp.gt.f32.partialorder %v406, 0.0
    %vm659 = vcmp.gt.f32.partialorder %v411, 0.0
    %vm660 = vcmp.gt.f32.partialorder %v414, 0.0
    %vm661 = vcmp.gt.f32.partialorder %v419, 0.0
    %vm662 = vcmp.gt.f32.partialorder %v422, 0.0
    %vm663 = vcmp.gt.f32.partialorder %v427, 0.0
    %vm664 = vcmp.gt.f32.partialorder %v430, 0.0
    %vm665 = vcmp.gt.f32.partialorder %v435, 0.0
    %vm666 = vcmp.gt.f32.partialorder %v438, 0.0
    %vm667 = vcmp.gt.f32.partialorder %v443, 0.0
    %vm668 = vcmp.gt.f32.partialorder %v446, 0.0
    %vm669 = vcmp.gt.f32.partialorder %v451, 0.0
    %vm670 = vcmp.gt.f32.partialorder %v454, 0.0
    %vm671 = vcmp.gt.f32.partialorder %v459, 0.0
    %vm672 = vcmp.gt.f32.partialorder %v462, 0.0
    %vm673 = vcmp.gt.f32.partialorder %v467, 0.0
    %vm674 = vcmp.gt.f32.partialorder %v470, 0.0
    %vm675 = vcmp.gt.f32.partialorder %v475, 0.0
    %vm676 = vcmp.gt.f32.partialorder %v478, 0.0
    %vm677 = vcmp.gt.f32.partialorder %v483, 0.0
    %vm678 = vcmp.gt.f32.partialorder %v486, 0.0
    %vm679 = vcmp.gt.f32.partialorder %v491, 0.0
    %vm680 = vcmp.gt.f32.partialorder %v494, 0.0
    %vm681 = vcmp.gt.f32.partialorder %v499, 0.0
    %vm682 = vcmp.gt.f32.partialorder %v502, 0.0
    %vm683 = vcmp.gt.f32.partialorder %v507, 0.0
    %vm684 = vcmp.gt.f32.partialorder %v510, 0.0
    %vm685 = vcmp.gt.f32.partialorder %v515, 0.0
    %vm686 = vcmp.gt.f32.partialorder %v518, 0.0
    %vm687 = vcmp.gt.f32.partialorder %v523, 0.0
    %vm688 = vcmp.gt.f32.partialorder %v526, 0.0
    %vm689 = vcmp.gt.f32.partialorder %v531, 0.0
    %vm690 = vcmp.gt.f32.partialorder %v534, 0.0
    %vm691 = vcmp.gt.f32.partialorder %v539, 0.0
    %vm692 = vcmp.gt.f32.partialorder %v542, 0.0
    %vm693 = vcmp.gt.f32.partialorder %v547, 0.0
    %vm694 = vcmp.gt.f32.partialorder %v550, 0.0
    %vm695 = vcmp.gt.f32.partialorder %v555, 0.0
    %vm696 = vcmp.gt.f32.partialorder %v558, 0.0
    %vm697 = vcmp.gt.f32.partialorder %v563, 0.0
    %vm698 = vcmp.gt.f32.partialorder %v566, 0.0
    %vm699 = vcmp.gt.f32.partialorder %v571, 0.0
    %vm700 = vcmp.gt.f32.partialorder %v574, 0.0
    %vm701 = vcmp.gt.f32.partialorder %v579, 0.0
    %vm702 = vcmp.gt.f32.partialorder %v582, 0.0
    %vm703 = vcmp.gt.f32.partialorder %v587, 0.0
    %vm704 = vcmp.gt.f32.partialorder %v590, 0.0
    %vm705 = vcmp.gt.f32.partialorder %v595, 0.0
    %vm706 = vcmp.gt.f32.partialorder %v598, 0.0
    %vm707 = vcmp.gt.f32.partialorder %v603, 0.0
    %vm708 = vcmp.gt.f32.partialorder %v606, 0.0
    %vm709 = vcmp.gt.f32.partialorder %v611, 0.0
    %vm710 = vcmp.gt.f32.partialorder %v614, 0.0
    %vm711 = vcmp.gt.f32.partialorder %v619, 0.0
    %vm712 = vcmp.gt.f32.partialorder %v622, 0.0
    %vm713 = vcmp.gt.f32.partialorder %v627, 0.0
    %vm714 = vcmp.gt.f32.partialorder %v630, 0.0
    %vm715 = vcmp.gt.f32.partialorder %v635, 0.0
    %vm716 = vcmp.gt.f32.partialorder %v638, 0.0
    %vm717 = vcmp.gt.f32.partialorder %v643, 0.0
    %vm718 = vcmp.gt.f32.partialorder %v646, 0.0
    %vm719 = vcmp.gt.f32.partialorder %v651, 0.0
    %vm720 = vcmp.gt.f32.partialorder %v654, 0.0
    %v721 = vmul.f32 %v403, 0.2
    %v722 = vmul.f32 %v406, 0.2
    %v723 = vmul.f32 %v411, 0.2
    %v724 = vmul.f32 %v414, 0.2
    %v725 = vmul.f32 %v419, 0.2
    %v726 = vmul.f32 %v422, 0.2
    %v727 = vmul.f32 %v427, 0.2
    %v728 = vmul.f32 %v430, 0.2
    %v729 = vmul.f32 %v435, 0.2
    %v730 = vmul.f32 %v438, 0.2
    %v731 = vmul.f32 %v443, 0.2
    %v732 = vmul.f32 %v446, 0.2
    %v733 = vmul.f32 %v451, 0.2
    %v734 = vmul.f32 %v454, 0.2
    %v735 = vmul.f32 %v459, 0.2
    %v736 = vmul.f32 %v462, 0.2
    %v737 = vmul.f32 %v467, 0.2
    %v738 = vmul.f32 %v470, 0.2
    %v739 = vmul.f32 %v475, 0.2
    %v740 = vmul.f32 %v478, 0.2
    %v741 = vmul.f32 %v483, 0.2
    %v742 = vmul.f32 %v486, 0.2
    %v743 = vmul.f32 %v491, 0.2
    %v744 = vmul.f32 %v494, 0.2
    %v745 = vmul.f32 %v499, 0.2
    %v746 = vmul.f32 %v502, 0.2
    %v747 = vmul.f32 %v507, 0.2
    %v748 = vmul.f32 %v510, 0.2
    %v749 = vmul.f32 %v515, 0.2
    %v750 = vmul.f32 %v518, 0.2
    %v751 = vmul.f32 %v523, 0.2
    %v752 = vmul.f32 %v526, 0.2
    %v753 = vmul.f32 %v531, 0.2
    %v754 = vmul.f32 %v534, 0.2
    %v755 = vmul.f32 %v539, 0.2
    %v756 = vmul.f32 %v542, 0.2
    %v757 = vmul.f32 %v547, 0.2
    %v758 = vmul.f32 %v550, 0.2
    %v759 = vmul.f32 %v555, 0.2
    %v760 = vmul.f32 %v558, 0.2
    %v761 = vmul.f32 %v563, 0.2
    %v762 = vmul.f32 %v566, 0.2
    %v763 = vmul.f32 %v571, 0.2
    %v764 = vmul.f32 %v574, 0.2
    %v765 = vmul.f32 %v579, 0.2
    %v766 = vmul.f32 %v582, 0.2
    %v767 = vmul.f32 %v587, 0.2
    %v768 = vmul.f32 %v590, 0.2
    %v769 = vmul.f32 %v595, 0.2
    %v770 = vmul.f32 %v598, 0.2
    %v771 = vmul.f32 %v603, 0.2
    %v772 = vmul.f32 %v606, 0.2
    %v773 = vmul.f32 %v611, 0.2
    %v774 = vmul.f32 %v614, 0.2
    %v775 = vmul.f32 %v619, 0.2
    %v776 = vmul.f32 %v622, 0.2
    %v777 = vmul.f32 %v627, 0.2
    %v778 = vmul.f32 %v630, 0.2
    %v779 = vmul.f32 %v635, 0.2
    %v780 = vmul.f32 %v638, 0.2
    %v781 = vmul.f32 %v643, 0.2
    %v782 = vmul.f32 %v646, 0.2
    %v783 = vmul.f32 %v651, 0.2
    %v784 = vmul.f32 %v654, 0.2
    %v785 = vsel %vm657, %v403, %v721
    %v786 = vsel %vm658, %v406, %v722
    %v787 = vsel %vm659, %v411, %v723
    %v788 = vsel %vm660, %v414, %v724
    %v789 = vsel %vm661, %v419, %v725
    %v790 = vsel %vm662, %v422, %v726
    %v791 = vsel %vm663, %v427, %v727
    %v792 = vsel %vm664, %v430, %v728
    %v793 = vsel %vm665, %v435, %v729
    %v794 = vsel %vm666, %v438, %v730
    %v795 = vsel %vm667, %v443, %v731
    %v796 = vsel %vm668, %v446, %v732
    %v797 = vsel %vm669, %v451, %v733
    %v798 = vsel %vm670, %v454, %v734
    %v799 = vsel %vm671, %v459, %v735
    %v800 = vsel %vm672, %v462, %v736
    %v801 = vsel %vm673, %v467, %v737
    %v802 = vsel %vm674, %v470, %v738
    %v803 = vsel %vm675, %v475, %v739
    %v804 = vsel %vm676, %v478, %v740
    %v805 = vsel %vm677, %v483, %v741
    %v806 = vsel %vm678, %v486, %v742
    %v807 = vsel %vm679, %v491, %v743
    %v808 = vsel %vm680, %v494, %v744
    %v809 = vsel %vm681, %v499, %v745
    %v810 = vsel %vm682, %v502, %v746
    %v811 = vsel %vm683, %v507, %v747
    %v812 = vsel %vm684, %v510, %v748
    %v813 = vsel %vm685, %v515, %v749
    %v814 = vsel %vm686, %v518, %v750
    %v815 = vsel %vm687, %v523, %v751
    %v816 = vsel %vm688, %v526, %v752
    %v817 = vsel %vm689, %v531, %v753
    %v818 = vsel %vm690, %v534, %v754
    %v819 = vsel %vm691, %v539, %v755
    %v820 = vsel %vm692, %v542, %v756
    %v821 = vsel %vm693, %v547, %v757
    %v822 = vsel %vm694, %v550, %v758
    %v823 = vsel %vm695, %v555, %v759
    %v824 = vsel %vm696, %v558, %v760
    %v825 = vsel %vm697, %v563, %v761
    %v826 = vsel %vm698, %v566, %v762
    %v827 = vsel %vm699, %v571, %v763
    %v828 = vsel %vm700, %v574, %v764
    %v829 = vsel %vm701, %v579, %v765
    %v830 = vsel %vm702, %v582, %v766
    %v831 = vsel %vm703, %v587, %v767
    %v832 = vsel %vm704, %v590, %v768
    %v833 = vsel %vm705, %v595, %v769
    %v834 = vsel %vm706, %v598, %v770
    %v835 = vsel %vm707, %v603, %v771
    %v836 = vsel %vm708, %v606, %v772
    %v837 = vsel %vm709, %v611, %v773
    %v838 = vsel %vm710, %v614, %v774
    %v839 = vsel %vm711, %v619, %v775
    %v840 = vsel %vm712, %v622, %v776
    %v841 = vsel %vm713, %v627, %v777
    %v842 = vsel %vm714, %v630, %v778
    %v843 = vsel %vm715, %v635, %v779
    %v844 = vsel %vm716, %v638, %v780
    %v845 = vsel %vm717, %v643, %v781
    %v846 = vsel %vm718, %v646, %v782
    %v847 = vsel %vm719, %v651, %v783
    %v848 = vsel %vm720, %v654, %v784
    %v849 = vpack.c.bf16 %v786, %v785
    %v850 = vpack.c.bf16 %v788, %v787
    %v851 = vpack.c.bf16 %v790, %v789
    %v852 = vpack.c.bf16 %v792, %v791
    %v853 = vpack.c.bf16 %v794, %v793
    %v854 = vpack.c.bf16 %v796, %v795
    %v855 = vpack.c.bf16 %v798, %v797
    %v856 = vpack.c.bf16 %v800, %v799
    %v857 = vpack.c.bf16 %v802, %v801
    %v858 = vpack.c.bf16 %v804, %v803
    %v859 = vpack.c.bf16 %v806, %v805
    %v860 = vpack.c.bf16 %v808, %v807
    %v861 = vpack.c.bf16 %v810, %v809
    %v862 = vpack.c.bf16 %v812, %v811
    %v863 = vpack.c.bf16 %v814, %v813
    %v864 = vpack.c.bf16 %v816, %v815
    %v865 = vpack.c.bf16 %v818, %v817
    %v866 = vpack.c.bf16 %v820, %v819
    %v867 = vpack.c.bf16 %v822, %v821
    %v868 = vpack.c.bf16 %v824, %v823
    %v869 = vpack.c.bf16 %v826, %v825
    %v870 = vpack.c.bf16 %v828, %v827
    %v871 = vpack.c.bf16 %v830, %v829
    %v872 = vpack.c.bf16 %v832, %v831
    %v873 = vpack.c.bf16 %v834, %v833
    %v874 = vpack.c.bf16 %v836, %v835
    %v875 = vpack.c.bf16 %v838, %v837
    %v876 = vpack.c.bf16 %v840, %v839
    %v877 = vpack.c.bf16 %v842, %v841
    %v878 = vpack.c.bf16 %v844, %v843
    %v879 = vpack.c.bf16 %v846, %v845
    %v880 = vpack.c.bf16 %v848, %v847
    %v913 = vunpack.c.l.b16 %v849
    %v914 = vunpack.c.h.b16 %v849
    %v915 = vunpack.c.l.b16 %v850
    %v916 = vunpack.c.h.b16 %v850
    %v917 = vunpack.c.l.b16 %v851
    %v918 = vunpack.c.h.b16 %v851
    %v919 = vunpack.c.l.b16 %v852
    %v920 = vunpack.c.h.b16 %v852
    %v921 = vunpack.c.l.b16 %v853
    %v922 = vunpack.c.h.b16 %v853
    %v923 = vunpack.c.l.b16 %v854
    %v924 = vunpack.c.h.b16 %v854
    %v925 = vunpack.c.l.b16 %v855
    %v926 = vunpack.c.h.b16 %v855
    %v927 = vunpack.c.l.b16 %v856
    %v928 = vunpack.c.h.b16 %v856
    %v929 = vunpack.c.l.b16 %v857
    %v930 = vunpack.c.h.b16 %v857
    %v931 = vunpack.c.l.b16 %v858
    %v932 = vunpack.c.h.b16 %v858
    %v933 = vunpack.c.l.b16 %v859
    %v934 = vunpack.c.h.b16 %v859
    %v935 = vunpack.c.l.b16 %v860
    %v936 = vunpack.c.h.b16 %v860
    %v937 = vunpack.c.l.b16 %v861
    %v938 = vunpack.c.h.b16 %v861
    %v939 = vunpack.c.l.b16 %v862
    %v940 = vunpack.c.h.b16 %v862
    %v941 = vunpack.c.l.b16 %v863
    %v942 = vunpack.c.h.b16 %v863
    %v943 = vunpack.c.l.b16 %v864
    %v944 = vunpack.c.h.b16 %v864
    %v945 = vunpack.c.l.b16 %v865
    %v946 = vunpack.c.h.b16 %v865
    %v947 = vunpack.c.l.b16 %v866
    %v948 = vunpack.c.h.b16 %v866
    %v949 = vunpack.c.l.b16 %v867
    %v950 = vunpack.c.h.b16 %v867
    %v951 = vunpack.c.l.b16 %v868
    %v952 = vunpack.c.h.b16 %v868
    %v953 = vunpack.c.l.b16 %v869
    %v954 = vunpack.c.h.b16 %v869
    %v955 = vunpack.c.l.b16 %v870
    %v956 = vunpack.c.h.b16 %v870
    %v957 = vunpack.c.l.b16 %v871
    %v958 = vunpack.c.h.b16 %v871
    %v959 = vunpack.c.l.b16 %v872
    %v960 = vunpack.c.h.b16 %v872
    %v961 = vunpack.c.l.b16 %v873
    %v962 = vunpack.c.h.b16 %v873
    %v963 = vunpack.c.l.b16 %v874
    %v964 = vunpack.c.h.b16 %v874
    %v965 = vunpack.c.l.b16 %v875
    %v966 = vunpack.c.h.b16 %v875
    %v967 = vunpack.c.l.b16 %v876
    %v968 = vunpack.c.h.b16 %v876
    %v969 = vunpack.c.l.b16 %v877
    %v970 = vunpack.c.h.b16 %v877
    %v971 = vunpack.c.l.b16 %v878
    %v972 = vunpack.c.h.b16 %v878
    %v973 = vunpack.c.l.b16 %v879
    %v974 = vunpack.c.h.b16 %v879
    %v975 = vunpack.c.l.b16 %v880
    %v976 = vunpack.c.h.b16 %v880
    %v977 = vpack.c.b16 %v913, %v913
    %v978 = vpack.c.b16 %v914, %v914
    %v979 = vpack.c.b16 %v915, %v915
    %v980 = vpack.c.b16 %v916, %v916
    %v981 = vpack.c.b16 %v917, %v917
    %v982 = vpack.c.b16 %v918, %v918
    %v983 = vpack.c.b16 %v919, %v919
    %v984 = vpack.c.b16 %v920, %v920
    %v985 = vpack.c.b16 %v921, %v921
    %v986 = vpack.c.b16 %v922, %v922
    %v987 = vpack.c.b16 %v923, %v923
    %v988 = vpack.c.b16 %v924, %v924
    %v989 = vpack.c.b16 %v925, %v925
    %v990 = vpack.c.b16 %v926, %v926
    %v991 = vpack.c.b16 %v927, %v927
    %v992 = vpack.c.b16 %v928, %v928
    %v993 = vpack.c.b16 %v929, %v929
    %v994 = vpack.c.b16 %v930, %v930
    %v995 = vpack.c.b16 %v931, %v931
    %v996 = vpack.c.b16 %v932, %v932
    %v997 = vpack.c.b16 %v933, %v933
    %v998 = vpack.c.b16 %v934, %v934
    %v999 = vpack.c.b16 %v935, %v935
    %v1000 = vpack.c.b16 %v936, %v936
    %v1001 = vpack.c.b16 %v937, %v937
    %v1002 = vpack.c.b16 %v938, %v938
    %v1003 = vpack.c.b16 %v939, %v939
    %v1004 = vpack.c.b16 %v940, %v940
    %v1005 = vpack.c.b16 %v941, %v941
    %v1006 = vpack.c.b16 %v942, %v942
    %v1007 = vpack.c.b16 %v943, %v943
    %v1008 = vpack.c.b16 %v944, %v944
    %v1009 = vpack.c.b16 %v945, %v945
    %v1010 = vpack.c.b16 %v946, %v946
    %v1011 = vpack.c.b16 %v947, %v947
    %v1012 = vpack.c.b16 %v948, %v948
    %v1013 = vpack.c.b16 %v949, %v949
    %v1014 = vpack.c.b16 %v950, %v950
    %v1015 = vpack.c.b16 %v951, %v951
    %v1016 = vpack.c.b16 %v952, %v952
    %v1017 = vpack.c.b16 %v953, %v953
    %v1018 = vpack.c.b16 %v954, %v954
    %v1019 = vpack.c.b16 %v955, %v955
    %v1020 = vpack.c.b16 %v956, %v956
    %v1021 = vpack.c.b16 %v957, %v957
    %v1022 = vpack.c.b16 %v958, %v958
    %v1023 = vpack.c.b16 %v959, %v959
    %v1024 = vpack.c.b16 %v960, %v960
    %v1025 = vpack.c.b16 %v961, %v961
    %v1026 = vpack.c.b16 %v962, %v962
    %v1027 = vpack.c.b16 %v963, %v963
    %v1028 = vpack.c.b16 %v964, %v964
    %v1029 = vpack.c.b16 %v965, %v965
    %v1030 = vpack.c.b16 %v966, %v966
    %v1031 = vpack.c.b16 %v967, %v967
    %v1032 = vpack.c.b16 %v968, %v968
    %v1033 = vpack.c.b16 %v969, %v969
    %v1034 = vpack.c.b16 %v970, %v970
    %v1035 = vpack.c.b16 %v971, %v971
    %v1036 = vpack.c.b16 %v972, %v972
    %v1037 = vpack.c.b16 %v973, %v973
    %v1038 = vpack.c.b16 %v974, %v974
    %v1039 = vpack.c.b16 %v975, %v975
    %v1040 = vpack.c.b16 %v976, %v976
    %1105 = vst [vmem:[#allocation2] sm:$0xf] %v977
    %1106 = vst [vmem:[#allocation2 + $0x4] sm:$0xf] %v978
    %1107 = vst [vmem:[#allocation2 + $0x8] sm:$0xf] %v979
    %1108 = vst [vmem:[#allocation2 + $0xc] sm:$0xf] %v980
    %1109 = vst [vmem:[#allocation2 + $0x10] sm:$0xf] %v981
    %1110 = vst [vmem:[#allocation2 + $0x14] sm:$0xf] %v982
    %1111 = vst [vmem:[#allocation2 + $0x18] sm:$0xf] %v983
    %1112 = vst [vmem:[#allocation2 + $0x1c] sm:$0xf] %v984
    %1113 = vst [vmem:[#allocation2 + $0x20] sm:$0xf] %v985
    %1114 = vst [vmem:[#allocation2 + $0x24] sm:$0xf] %v986
    %1115 = vst [vmem:[#allocation2 + $0x28] sm:$0xf] %v987
    %1116 = vst [vmem:[#allocation2 + $0x2c] sm:$0xf] %v988
    %1117 = vst [vmem:[#allocation2 + $0x30] sm:$0xf] %v989
    %1118 = vst [vmem:[#allocation2 + $0x34] sm:$0xf] %v990
    %1119 = vst [vmem:[#allocation2 + $0x38] sm:$0xf] %v991
    %1120 = vst [vmem:[#allocation2 + $0x3c] sm:$0xf] %v992
    %1121 = vst [vmem:[#allocation2 + $0x40] sm:$0xf] %v993
    %1122 = vst [vmem:[#allocation2 + $0x44] sm:$0xf] %v994
    %1123 = vst [vmem:[#allocation2 + $0x48] sm:$0xf] %v995
    %1124 = vst [vmem:[#allocation2 + $0x4c] sm:$0xf] %v996
    %1125 = vst [vmem:[#allocation2 + $0x50] sm:$0xf] %v997
    %1126 = vst [vmem:[#allocation2 + $0x54] sm:$0xf] %v998
    %1127 = vst [vmem:[#allocation2 + $0x58] sm:$0xf] %v999
    %1128 = vst [vmem:[#allocation2 + $0x5c] sm:$0xf] %v1000
    %1129 = vst [vmem:[#allocation2 + $0x60] sm:$0xf] %v1001
    %1130 = vst [vmem:[#allocation2 + $0x64] sm:$0xf] %v1002
    %1131 = vst [vmem:[#allocation2 + $0x68] sm:$0xf] %v1003
    %1132 = vst [vmem:[#allocation2 + $0x6c] sm:$0xf] %v1004
    %1133 = vst [vmem:[#allocation2 + $0x70] sm:$0xf] %v1005
    %1134 = vst [vmem:[#allocation2 + $0x74] sm:$0xf] %v1006
    %1135 = vst [vmem:[#allocation2 + $0x78] sm:$0xf] %v1007
    %1136 = vst [vmem:[#allocation2 + $0x7c] sm:$0xf] %v1008
    %1137 = vst [vmem:[#allocation2 + $0x80] sm:$0xf] %v1009
    %1138 = vst [vmem:[#allocation2 + $0x84] sm:$0xf] %v1010
    %1139 = vst [vmem:[#allocation2 + $0x88] sm:$0xf] %v1011
    %1140 = vst [vmem:[#allocation2 + $0x8c] sm:$0xf] %v1012
    %1141 = vst [vmem:[#allocation2 + $0x90] sm:$0xf] %v1013
    %1142 = vst [vmem:[#allocation2 + $0x94] sm:$0xf] %v1014
    %1143 = vst [vmem:[#allocation2 + $0x98] sm:$0xf] %v1015
    %1144 = vst [vmem:[#allocation2 + $0x9c] sm:$0xf] %v1016
    %1145 = vst [vmem:[#allocation2 + $0xa0] sm:$0xf] %v1017
    %1146 = vst [vmem:[#allocation2 + $0xa4] sm:$0xf] %v1018
    %1147 = vst [vmem:[#allocation2 + $0xa8] sm:$0xf] %v1019
    %1148 = vst [vmem:[#allocation2 + $0xac] sm:$0xf] %v1020
    %1149 = vst [vmem:[#allocation2 + $0xb0] sm:$0xf] %v1021
    %1150 = vst [vmem:[#allocation2 + $0xb4] sm:$0xf] %v1022
    %1151 = vst [vmem:[#allocation2 + $0xb8] sm:$0xf] %v1023
    %1152 = vst [vmem:[#allocation2 + $0xbc] sm:$0xf] %v1024
    %1153 = vst [vmem:[#allocation2 + $0xc0] sm:$0xf] %v1025
    %1154 = vst [vmem:[#allocation2 + $0xc4] sm:$0xf] %v1026
    %1155 = vst [vmem:[#allocation2 + $0xc8] sm:$0xf] %v1027
    %1156 = vst [vmem:[#allocation2 + $0xcc] sm:$0xf] %v1028
    %1157 = vst [vmem:[#allocation2 + $0xd0] sm:$0xf] %v1029
    %1158 = vst [vmem:[#allocation2 + $0xd4] sm:$0xf] %v1030
    %1159 = vst [vmem:[#allocation2 + $0xd8] sm:$0xf] %v1031
    %1160 = vst [vmem:[#allocation2 + $0xdc] sm:$0xf] %v1032
    %1161 = vst [vmem:[#allocation2 + $0xe0] sm:$0xf] %v1033
    %1162 = vst [vmem:[#allocation2 + $0xe4] sm:$0xf] %v1034
    %1163 = vst [vmem:[#allocation2 + $0xe8] sm:$0xf] %v1035
    %1164 = vst [vmem:[#allocation2 + $0xec] sm:$0xf] %v1036
    %1165 = vst [vmem:[#allocation2 + $0xf0] sm:$0xf] %v1037
    %1166 = vst [vmem:[#allocation2 + $0xf4] sm:$0xf] %v1038
    %1167 = vst [vmem:[#allocation2 + $0xf8] sm:$0xf] %v1039
    %1168 = vst [vmem:[#allocation2 + $0xfc] sm:$0xf] %v1040
    // Predicated region
    $region14: #{tpu_custom_call.1} parent=1 // pred_check
      _
    $region15: #{tpu_custom_call.1} parent=1 // pred_check_branch
      %1170 = sbr.rel (0) target = $region17
    $region16: #{tpu_custom_call.1} parent=1 // pred_region
      %s1172 = ssub.s32 4096, 4096
      %1173 = vsyncadd [#allocation3], %s1172
      %s1174 = sshll.u32 [#allocation2], 4
      %s1175 = int_to_ptr.vmem [resolvable:$true] %s1174
      %1180 = dma.vmem_to_hbm [thread:$0]  %s1175, 4096, %s3, [#allocation3], 64, 64, 4
    $region17: #{tpu_custom_call.1} parent=1 // pred_fallthru
      _
    // Predicated region
    $region18: #{tpu_custom_call.1} parent=1 // pred_check
      _
    $region19: #{tpu_custom_call.1} parent=1 // pred_check_branch
      %1182 = sbr.rel (0) target = $region21
    $region20: #{tpu_custom_call.1} parent=1 // pred_region
      %1183 = dma.done [#allocation3], 4096
    $region21: #{tpu_custom_call.1} parent=1 // pred_fallthru
      _
    %1184 = vsyncpa [#allocation3], 1

</llo_original>
